<compile_context>
chip_gen: v5e
topology: v5e:2x2
jax: 0.10.0
libtpu: 0.0.40
codegen_flags: <defaults>
</compile_context>

<pallas_src>
import jax
import jax.numpy as jnp
from jax.experimental import pallas as pl
from jax.experimental.pallas import tpu as pltpu


def mlp_kernel(x_ref, w1_ref, b1_ref, w2_ref, b2_ref, o_ref):
    x = x_ref[...]                                            # (TILE_B, D_in) f32
    # Layer 1 on the MXU, f32 accumulation (matches the f32 reference; on
    # v6e/v7x a bf16 cast would ~2x MXU throughput but break 1e-5 tolerance).
    h = jnp.dot(x, w1_ref[...], preferred_element_type=jnp.float32)
    h = jnp.maximum(h + b1_ref[...], 0.0)                     # bias + ReLU (VPU)
    # Layer 2 (hidden -> 1): VPU multiply + XLU lane reduction; MXU stays free.
    z = jnp.sum(h * w2_ref[...], axis=-1, keepdims=True) + b2_ref[0, 0]
    o_ref[...] = jax.nn.sigmoid(z).astype(o_ref.dtype)        # sigmoid (EUP)


def mymodel_forward(x, w1, b1, w2, b2, *, tile_b=1024):
    """x: (B, D_in) f32; w1: (D_in, H); b1: (1, H); w2: (1, H); b2: (1, 1)."""
    B, d_in = x.shape
    hidden = w1.shape[1]

    # Batch tile: large enough to amortize per-grid-step overhead (~0.35 us),
    # multiple of 8 (f32 sublane packing). Falls back to one full-batch block
    # if B is not sublane-aligned. VMEM per step is tiny (tens/hundreds of
    # KiB even with double-buffering), far under the scoped limit on every
    # generation (v5e/v6e/v7x).
    tb = min(tile_b, B)
    if B % 8 == 0:
        tb = max(8, (tb // 8) * 8)
        while B % tb != 0:            # keep the grid exact (no ragged tail)
            tb -= 8
    else:
        tb = B
    grid = (pl.cdiv(B, tb),)

    return pl.pallas_call(
        mlp_kernel,
        out_shape=jax.ShapeDtypeStruct((B, 1), jnp.float32),
        grid=grid,
        in_specs=[
            pl.BlockSpec((tb, d_in), lambda i: (i, 0)),        # x: streamed
            pl.BlockSpec((d_in, hidden), lambda i: (0, 0)),    # w1: resident
            pl.BlockSpec((1, hidden), lambda i: (0, 0)),       # b1: resident
            pl.BlockSpec((1, hidden), lambda i: (0, 0)),       # w2: resident
            pl.BlockSpec((1, 1), lambda i: (0, 0),
                         memory_space=pltpu.SMEM),             # b2: scalar
        ],
        out_specs=pl.BlockSpec((tb, 1), lambda i: (i, 0)),
        compiler_params=pltpu.CompilerParams(
            dimension_semantics=("parallel",),
        ),
    )(x, w1, b1, w2, b2)


def reference_forward(x, w1, b1, w2, b2):
    h = jnp.maximum(x @ w1 + b1, 0.0)
    return jax.nn.sigmoid(h @ w2.T + b2)


if __name__ == "__main__":
    # Small shapes consistent with the module; B=256 with tile_b=128 exercises
    # a 2-step pipelined grid while staying tiny.
    B, D_IN, HIDDEN = 256, 32, 64

    key = jax.random.PRNGKey(0)
    kx, kw1, kb1, kw2, kb2 = jax.random.split(key, 5)

    x = jax.random.normal(kx, (B, D_IN), dtype=jnp.float32)

    # PyTorch Linear params (W (out, in), b (out,)) stored pre-transposed:
    # w1 = W1.T (D_in, H); w2 = W2 as a (1, H) row; biases as 2-D rows/scalar.
    w1 = jax.random.normal(kw1, (D_IN, HIDDEN), dtype=jnp.float32) * 0.1
    b1 = jax.random.normal(kb1, (1, HIDDEN), dtype=jnp.float32) * 0.1
    w2 = jax.random.normal(kw2, (1, HIDDEN), dtype=jnp.float32) * 0.1
    b2 = jax.random.normal(kb2, (1, 1), dtype=jnp.float32) * 0.1

    out = mymodel_forward(x, w1, b1, w2, b2, tile_b=128)
    out = jax.block_until_ready(out)

    ref = reference_forward(x, w1, b1, w2, b2)
    assert out.shape == (B, 1), out.shape
    assert jnp.allclose(out, ref, atol=1e-5, rtol=1e-5), "mismatch vs reference"

    print("KERNEL_OK")
</pallas_src>

<mosaic_0001>
module attributes {stable_mosaic.version = 11 : i64} {
  func.func @mlp_kernel(%arg0: i32, %arg1: memref<128x32xf32, #tpu.memory_space<vmem>>, %arg2: memref<32x64xf32, #tpu.memory_space<vmem>>, %arg3: memref<1x64xf32, #tpu.memory_space<vmem>>, %arg4: memref<1x64xf32, #tpu.memory_space<vmem>>, %arg5: memref<1x1xf32, #tpu.memory_space<smem>>, %arg6: memref<128x1xf32, #tpu.memory_space<vmem>>) attributes {dimension_semantics = [#tpu.dimension_semantics<parallel>], iteration_bounds = array<i64: 2>, scalar_prefetch = 0 : i64, scratch_operands = 0 : i64, tpu.core_type = #tpu.core_type<tc>, window_params = [{transform_indices = @transform_0, window_bounds = array<i64: 128, 32>}, {pipeline_mode = #tpu.pipeline_mode<synchronous>, transform_indices = @transform_1, window_bounds = array<i64: 32, 64>}, {pipeline_mode = #tpu.pipeline_mode<synchronous>, transform_indices = @transform_2, window_bounds = array<i64: 1, 64>}, {pipeline_mode = #tpu.pipeline_mode<synchronous>, transform_indices = @transform_3, window_bounds = array<i64: 1, 64>}, {transform_indices = @transform_4, window_bounds = array<i64: 1, 1>}, {transform_indices = @transform_5, window_bounds = array<i64: 128, 1>}]} {
    %c0 = arith.constant 0 : index
    %c0_0 = arith.constant 0 : index
    %0 = vector.load %arg1[%c0, %c0_0] : memref<128x32xf32, #tpu.memory_space<vmem>>, vector<128x32xf32>
    %c0_1 = arith.constant 0 : index
    %c0_2 = arith.constant 0 : index
    %1 = vector.load %arg2[%c0_1, %c0_2] : memref<32x64xf32, #tpu.memory_space<vmem>>, vector<32x64xf32>
    %cst = arith.constant dense<0.000000e+00> : vector<128x64xf32>
    %2 = tpu.matmul %0, %1, %cst {dimension_numbers = #tpu.dot_dimension_numbers<[1], [0], [0], [1], [0, 0, 1, 1], [], []>} : vector<128x32xf32>, vector<32x64xf32>, vector<128x64xf32> -> vector<128x64xf32>
    %c0_3 = arith.constant 0 : index
    %c0_4 = arith.constant 0 : index
    %3 = vector.load %arg3[%c0_3, %c0_4] : memref<1x64xf32, #tpu.memory_space<vmem>>, vector<1x64xf32>
    %4 = vector.broadcast %3 : vector<1x64xf32> to vector<128x64xf32>
    %5 = arith.addf %2, %4 : vector<128x64xf32>
    %cst_5 = arith.constant 0.000000e+00 : f32
    %6 = vector.broadcast %cst_5 : f32 to vector<128x64xf32>
    %7 = arith.maximumf %5, %6 : vector<128x64xf32>
    %c0_6 = arith.constant 0 : index
    %c0_7 = arith.constant 0 : index
    %8 = vector.load %arg4[%c0_6, %c0_7] : memref<1x64xf32, #tpu.memory_space<vmem>>, vector<1x64xf32>
    %9 = vector.broadcast %8 : vector<1x64xf32> to vector<128x64xf32>
    %10 = arith.mulf %7, %9 : vector<128x64xf32>
    %cst_8 = arith.constant dense<0.000000e+00> : vector<128xf32>
    %11 = vector.multi_reduction <add>, %10, %cst_8 [1] : vector<128x64xf32> to vector<128xf32>
    %12 = vector.shape_cast %11 : vector<128xf32> to vector<128x1xf32>
    %c0_9 = arith.constant 0 : index
    %c0_10 = arith.constant 0 : index
    %13 = memref.load %arg5[%c0_9, %c0_10] : memref<1x1xf32, #tpu.memory_space<smem>>
    %14 = vector.broadcast %13 : f32 to vector<128x1xf32>
    %15 = arith.addf %12, %14 : vector<128x1xf32>
    %16 = arith.negf %15 : vector<128x1xf32>
    %17 = math.exp %16 : vector<128x1xf32>
    %cst_11 = arith.constant 1.000000e+00 : f32
    %18 = vector.broadcast %cst_11 : f32 to vector<128x1xf32>
    %19 = arith.addf %18, %17 : vector<128x1xf32>
    %20 = arith.divf %18, %19 : vector<128x1xf32>
    %c0_12 = arith.constant 0 : index
    %c0_13 = arith.constant 0 : index
    %21 = vector.load %arg6[%c0_12, %c0_13] : memref<128x1xf32, #tpu.memory_space<vmem>>, vector<128x1xf32>
    tpu.vector_store %arg6[%c0_12, %c0_13], %20 {strides = array<i32>} : memref<128x1xf32, #tpu.memory_space<vmem>>, vector<128x1xf32>,
    return
  }
  func.func @transform_0(%arg0: i32) -> (i32, i32) {
    %c0_i32 = arith.constant 0 : i32
    %c0_i32_0 = arith.constant 0 : i32
    return %arg0, %c0_i32 : i32, i32
  }
  func.func @transform_1(%arg0: i32) -> (i32, i32) {
    %c0_i32 = arith.constant 0 : i32
    %c0_i32_0 = arith.constant 0 : i32
    %c0_i32_1 = arith.constant 0 : i32
    return %c0_i32, %c0_i32_0 : i32, i32
  }
  func.func @transform_2(%arg0: i32) -> (i32, i32) {
    %c0_i32 = arith.constant 0 : i32
    %c0_i32_0 = arith.constant 0 : i32
    %c0_i32_1 = arith.constant 0 : i32
    return %c0_i32, %c0_i32_0 : i32, i32
  }
  func.func @transform_3(%arg0: i32) -> (i32, i32) {
    %c0_i32 = arith.constant 0 : i32
    %c0_i32_0 = arith.constant 0 : i32
    %c0_i32_1 = arith.constant 0 : i32
    return %c0_i32, %c0_i32_0 : i32, i32
  }
  func.func @transform_4(%arg0: i32) -> (i32, i32) {
    %c0_i32 = arith.constant 0 : i32
    %c0_i32_0 = arith.constant 0 : i32
    %c0_i32_1 = arith.constant 0 : i32
    return %c0_i32, %c0_i32_0 : i32, i32
  }
  func.func @transform_5(%arg0: i32) -> (i32, i32) {
    %c0_i32 = arith.constant 0 : i32
    %c0_i32_0 = arith.constant 0 : i32
    return %arg0, %c0_i32 : i32, i32
  }
}

</mosaic_0001>

<llo_original>
// kernel: tpu_custom_call.1
$region0: #{tpu_custom_call.1}
  #allocation0 [shape = 'u32[]', space=smem, size = 0x4, offset = 0x4, fixed_abs, tag = 'smem constant byte address 0x4 - core index']
  #allocation1 [shape = 'u32[72,128]{1,0:T(1,128)}', space=vmem, size = 0x9000, scoped, tag = 'internal scratch']
  #allocation2 [shape = 'f32[1,1]{1,0:T(1,128)S(6)}', space=smem, size = 0x200, scoped, tag = 'scoped memory for tpu_custom_call.1']
  %s0 = inlined_call_operand.vmem [shape: f32[256,32], index: 0, kind: input, shape index: {}]
  %s1 = inlined_call_operand.vmem [shape: f32[32,64], index: 1, kind: input, shape index: {}]
  %s2 = inlined_call_operand.vmem [shape: f32[1,64], index: 2, kind: input, shape index: {}]
  %s3 = inlined_call_operand.vmem [shape: f32[1,64], index: 3, kind: input, shape index: {}]
  %s4 = inlined_call_operand.<no memory space> [shape: f32[1,1], index: 4, kind: input, shape index: {}]
  %s5 = inlined_call_operand.vmem [shape: f32[256,1], index: 5, kind: output, shape index: {}]
  %s6 = sld [smem:[#allocation0]]
  $region53: #{tpu_custom_call.1} parent=0
    _
  %s8 = ssub.s32 1, %s6
  %s9 = scalar_select 0, %s8, %s6
  %10 = sst [smem:[#allocation2]] %s4
  loop: start=0, step=1, limit=4
  $region2: #{tpu_custom_call.1} parent=0 // loop_pre_header
    _
  $region3: #{tpu_custom_call.1} parent=0 // loop_header
    %s12 = sphi 0, %s16
    %p13 = scmp.ge.s32.totalorder %s12, 4
    %s22 = sphi 0, %s24
    %s25 = sphi 0, %s22
    %s26 = sphi 0, %s25
    %s42 = sphi 0, %s26
    %s46 = sphi 0, %s46
    %s48 = sphi 0, %s46
    %s49 = sphi 0, %s48
    %s63 = sphi 0, %s49
    %s67 = sphi 0, %s67
    %s69 = sphi 0, %s67
    %s70 = sphi 0, %s69
    %s84 = sphi 0, %s70
    %s88 = sphi 0, %s88
    %s90 = sphi 0, %s88
    %s91 = sphi 0, %s90
    %s105 = sphi 0, %s91
    %s109 = sphi 0, %s109
    %s111 = sphi 0, %s109
    %s112 = sphi 0, %s111
    %s126 = sphi 0, %s112
    %s132 = sphi 0, %s134
    %s135 = sphi 0, %s132
    %s136 = sphi 0, %s135
    %s152 = sphi 0, %s136
  $region4: #{tpu_custom_call.1} parent=0 // loop_header_branch
    %15 = sbr.rel (%p13) target = $region8
  $region5: #{tpu_custom_call.1} parent=0 // loop_body
    %s17 = ssub.s32 %s12, 1
    %s18 = ssub.s32 %s12, 2
    %s19 = sadd.s32 %s12, 1
    %s20 = ssub.s32 %s12, %s19
    %p21 = scmp.eq.s32.totalorder %s20, 0
    %s23 = sadd.s32 %s22, 1
    %s24 = scalar_select %p21, %s22, %s23
    %p27 = pneg %p21
    %p28 = scmp.eq.s32.totalorder %s12, 1
    %p29 = por %p27, %p28
    %p30 = scmp.ne.s32.totalorder %s22, %s25
    %p31 = scmp.eq.s32.totalorder %s12, 0
    %p32 = por %p30, %p31
    %p33 = scmp.ne.s32.totalorder %s22, %s25
    %p34 = scmp.eq.s32.totalorder %s17, 1
    %p35 = por %p33, %p34
    %p36 = scmp.ne.s32.totalorder %s25, %s26
    %p37 = scmp.eq.s32.totalorder %s17, 0
    %p38 = por %p36, %p37
    %p39 = scmp.ne.s32.totalorder %s25, %s26
    %p40 = scmp.eq.s32.totalorder %s18, 1
    %p41 = por %p39, %p40
    %p43 = scmp.ne.s32.totalorder %s26, %s42
    %p44 = scmp.eq.s32.totalorder %s18, 0
    %p45 = por %p43, %p44
    %s47 = sadd.s32 %s46, 1
    %p50 = scmp.eq.s32.totalorder %s12, 1
    %p51 = scmp.ne.s32.totalorder %s46, %s48
    %p52 = scmp.eq.s32.totalorder %s12, 0
    %p53 = por %p51, %p52
    %p54 = scmp.ne.s32.totalorder %s46, %s48
    %p55 = scmp.eq.s32.totalorder %s17, 1
    %p56 = por %p54, %p55
    %p57 = scmp.ne.s32.totalorder %s48, %s49
    %p58 = scmp.eq.s32.totalorder %s17, 0
    %p59 = por %p57, %p58
    %p60 = scmp.ne.s32.totalorder %s48, %s49
    %p61 = scmp.eq.s32.totalorder %s18, 1
    %p62 = por %p60, %p61
    %p64 = scmp.ne.s32.totalorder %s49, %s63
    %p65 = scmp.eq.s32.totalorder %s18, 0
    %p66 = por %p64, %p65
    %s68 = sadd.s32 %s67, 1
    %p71 = scmp.eq.s32.totalorder %s12, 1
    %p72 = scmp.ne.s32.totalorder %s67, %s69
    %p73 = scmp.eq.s32.totalorder %s12, 0
    %p74 = por %p72, %p73
    %p75 = scmp.ne.s32.totalorder %s67, %s69
    %p76 = scmp.eq.s32.totalorder %s17, 1
    %p77 = por %p75, %p76
    %p78 = scmp.ne.s32.totalorder %s69, %s70
    %p79 = scmp.eq.s32.totalorder %s17, 0
    %p80 = por %p78, %p79
    %p81 = scmp.ne.s32.totalorder %s69, %s70
    %p82 = scmp.eq.s32.totalorder %s18, 1
    %p83 = por %p81, %p82
    %p85 = scmp.ne.s32.totalorder %s70, %s84
    %p86 = scmp.eq.s32.totalorder %s18, 0
    %p87 = por %p85, %p86
    %s89 = sadd.s32 %s88, 1
    %p92 = scmp.eq.s32.totalorder %s12, 1
    %p93 = scmp.ne.s32.totalorder %s88, %s90
    %p94 = scmp.eq.s32.totalorder %s12, 0
    %p95 = por %p93, %p94
    %p96 = scmp.ne.s32.totalorder %s88, %s90
    %p97 = scmp.eq.s32.totalorder %s17, 1
    %p98 = por %p96, %p97
    %p99 = scmp.ne.s32.totalorder %s90, %s91
    %p100 = scmp.eq.s32.totalorder %s17, 0
    %p101 = por %p99, %p100
    %p102 = scmp.ne.s32.totalorder %s90, %s91
    %p103 = scmp.eq.s32.totalorder %s18, 1
    %p104 = por %p102, %p103
    %p106 = scmp.ne.s32.totalorder %s91, %s105
    %p107 = scmp.eq.s32.totalorder %s18, 0
    %p108 = por %p106, %p107
    %s110 = sadd.s32 %s109, 1
    %p113 = scmp.eq.s32.totalorder %s12, 1
    %p114 = scmp.ne.s32.totalorder %s109, %s111
    %p115 = scmp.eq.s32.totalorder %s12, 0
    %p116 = por %p114, %p115
    %p117 = scmp.ne.s32.totalorder %s109, %s111
    %p118 = scmp.eq.s32.totalorder %s17, 1
    %p119 = por %p117, %p118
    %p120 = scmp.ne.s32.totalorder %s111, %s112
    %p121 = scmp.eq.s32.totalorder %s17, 0
    %p122 = por %p120, %p121
    %p123 = scmp.ne.s32.totalorder %s111, %s112
    %p124 = scmp.eq.s32.totalorder %s18, 1
    %p125 = por %p123, %p124
    %p127 = scmp.ne.s32.totalorder %s112, %s126
    %p128 = scmp.eq.s32.totalorder %s18, 0
    %p129 = por %p127, %p128
    %s130 = ssub.s32 %s12, %s19
    %p131 = scmp.eq.s32.totalorder %s130, 0
    %s133 = sadd.s32 %s132, 1
    %s134 = scalar_select %p131, %s132, %s133
    %p137 = pneg %p131
    %p138 = scmp.eq.s32.totalorder %s12, 1
    %p139 = por %p137, %p138
    %p140 = scmp.ne.s32.totalorder %s132, %s135
    %p141 = scmp.eq.s32.totalorder %s12, 0
    %p142 = por %p140, %p141
    %p143 = scmp.ne.s32.totalorder %s132, %s135
    %p144 = scmp.eq.s32.totalorder %s17, 1
    %p145 = por %p143, %p144
    %p146 = scmp.ne.s32.totalorder %s135, %s136
    %p147 = scmp.eq.s32.totalorder %s17, 0
    %p148 = por %p146, %p147
    %p149 = scmp.ne.s32.totalorder %s135, %s136
    %p150 = scmp.eq.s32.totalorder %s18, 1
    %p151 = por %p149, %p150
    %p153 = scmp.ne.s32.totalorder %s136, %s152
    %p154 = scmp.eq.s32.totalorder %s18, 0
    %p155 = por %p153, %p154
    %p156 = scmp.le.s32.totalorder 1, %s12
    %p157 = scmp.lt.s32.totalorder %s12, 3
    %p158 = pnand %p156, %p157
    %p159 = pneg %p158
    // Predicated region
    $region9: #{tpu_custom_call.1} parent=5 // pred_check
      _
    $region10: #{tpu_custom_call.1} parent=5 // pred_check_branch
      %161 = sbr.rel (%p158) target = $region12
    $region11: #{tpu_custom_call.1} parent=5 // pred_region
      %s162 = ssub.s32 %s12, 1
      // Predicated region
      $region13: #{tpu_custom_call.1} parent=11 // pred_check
        %p163 = pneg %p59
      $region14: #{tpu_custom_call.1} parent=11 // pred_check_branch
        %165 = sbr.rel (%p163) target = $region16
      $region15: #{tpu_custom_call.1} parent=11 // pred_region
        _
      $region16: #{tpu_custom_call.1} parent=11 // pred_fallthru
        _
      // Predicated region
      $region17: #{tpu_custom_call.1} parent=11 // pred_check
        %p166 = pneg %p80
      $region18: #{tpu_custom_call.1} parent=11 // pred_check_branch
        %168 = sbr.rel (%p166) target = $region20
      $region19: #{tpu_custom_call.1} parent=11 // pred_region
        _
      $region20: #{tpu_custom_call.1} parent=11 // pred_fallthru
        _
      // Predicated region
      $region21: #{tpu_custom_call.1} parent=11 // pred_check
        %p169 = pneg %p101
      $region22: #{tpu_custom_call.1} parent=11 // pred_check_branch
        %171 = sbr.rel (%p169) target = $region24
      $region23: #{tpu_custom_call.1} parent=11 // pred_region
        _
      $region24: #{tpu_custom_call.1} parent=11 // pred_fallthru
        _
      // Predicated region
      $region25: #{tpu_custom_call.1} parent=11 // pred_check
        %p172 = pneg %p122
      $region26: #{tpu_custom_call.1} parent=11 // pred_check_branch
        %174 = sbr.rel (%p172) target = $region28
      $region27: #{tpu_custom_call.1} parent=11 // pred_region
        _
      $region28: #{tpu_custom_call.1} parent=11 // pred_fallthru
        _
    $region12: #{tpu_custom_call.1} parent=5 // pred_fallthru
      _
    %p175 = scmp.lt.s32.totalorder %s12, 2
    // Predicated region
    $region29: #{tpu_custom_call.1} parent=5 // pred_check
      %p176 = pneg %p175
    $region30: #{tpu_custom_call.1} parent=5 // pred_check_branch
      %178 = sbr.rel (%p176) target = $region32
    $region31: #{tpu_custom_call.1} parent=5 // pred_region
      // Predicated region
      $region33: #{tpu_custom_call.1} parent=31 // pred_check
        %p179 = pneg %p32
      $region34: #{tpu_custom_call.1} parent=31 // pred_check_branch
        %181 = sbr.rel (%p179) target = $region36
      $region35: #{tpu_custom_call.1} parent=31 // pred_region
        %s182 = smul.u32 16, %s12
        %p183 = scmp.lt.s32.totalorder %s182, 31
        %s184 = scalar_select %p183, %s182, 31
        %s185 = smul.addr %s184, 8
        %s186 = scalar_lea.vmem %s0, %s185
        %s187 = smul.u32 16, %s12
      $region36: #{tpu_custom_call.1} parent=31 // pred_fallthru
        _
    $region32: #{tpu_custom_call.1} parent=5 // pred_fallthru
      _
    %p188 = scmp.le.s32.totalorder 1, %s12
    %p189 = scmp.lt.s32.totalorder %s12, 3
    %p190 = pnand %p188, %p189
    %p191 = pneg %p190
    // Predicated region
    $region37: #{tpu_custom_call.1} parent=5 // pred_check
      _
    $region38: #{tpu_custom_call.1} parent=5 // pred_check_branch
      %193 = sbr.rel (%p190) target = $region40
    $region39: #{tpu_custom_call.1} parent=5 // pred_region
      %s194 = ssub.s32 %s12, 1
      %s195 = smul.u32 16, %s17
      %p196 = scmp.lt.s32.totalorder %s195, 31
      %s197 = scalar_select %p196, %s195, 31
      %s198 = smul.addr %s197, 8
      %s199 = scalar_lea.vmem %s0, %s198
      %p200 = pneg %p38
      %p201 = pneg %p35
      %p202 = pneg %p59
      %p203 = pneg %p56
      %p204 = pneg %p80
      %p205 = pneg %p77
      %p206 = pneg %p101
      %p207 = pneg %p98
      %p208 = pneg %p122
      %p209 = pneg %p119
      %p210 = pneg %p148
      %p211 = pneg %p145
      %s212 = smul.u32 16, %s17
      %p213 = scmp.lt.s32.totalorder %s212, 31
      %s214 = scalar_select %p213, %s212, 31
      %s215 = smul.addr %s214, 8
      %s216 = scalar_lea.vmem %s5, %s215
      %s217 = smul.u32 16, %s17
      %p218 = scmp.lt.s32.totalorder %s217, 31
      %s219 = scalar_select %p218, %s217, 31
      %s220 = smul.addr %s219, 8
      %s221 = scalar_lea.vmem %s0, %s220
      %s222 = smul.u32 16, %s17
      %s223 = smul.u32 16, %s17
      %p224 = scmp.lt.s32.totalorder %s223, 31
      %s225 = scalar_select %p224, %s223, 31
      %s226 = smul.addr %s225, 8
      %s227 = scalar_lea.vmem %s5, %s226
      %s228 = smul.u32 16, %s17
      %v229 = vld [vmem:[%s221] sm:$0xff]
      %v230 = vld [vmem:[%s221 + $0x8] sm:$0xff]
      %v231 = vld [vmem:[%s221 + $0x10] sm:$0xff]
      %v232 = vld [vmem:[%s221 + $0x18] sm:$0xff]
      %v233 = vld [vmem:[%s221 + $0x20] sm:$0xff]
      %v234 = vld [vmem:[%s221 + $0x28] sm:$0xff]
      %v235 = vld [vmem:[%s221 + $0x30] sm:$0xff]
      %v236 = vld [vmem:[%s221 + $0x38] sm:$0xff]
      %v237 = vld [vmem:[%s221 + $0x40] sm:$0xff]
      %v238 = vld [vmem:[%s221 + $0x48] sm:$0xff]
      %v239 = vld [vmem:[%s221 + $0x50] sm:$0xff]
      %v240 = vld [vmem:[%s221 + $0x58] sm:$0xff]
      %v241 = vld [vmem:[%s221 + $0x60] sm:$0xff]
      %v242 = vld [vmem:[%s221 + $0x68] sm:$0xff]
      %v243 = vld [vmem:[%s221 + $0x70] sm:$0xff]
      %v244 = vld [vmem:[%s221 + $0x78] sm:$0xff]
      %v245 = vld [vmem:[%s1] sm:$0xff]
      %v246 = vld [vmem:[%s1 + $0x8] sm:$0xff]
      %v247 = vld [vmem:[%s1 + $0x10] sm:$0xff]
      %v248 = vld [vmem:[%s1 + $0x18] sm:$0xff]
      %v249 = vld [vmem:[%s2] sm:$0x1]
      %v251 = vperm.slane %v249, 0
      %vm253 = vcmask 261120
      %v255 = vsel %vm253, %v229, 0
      %v258 = vsel %vm253, %v230, 0
      %v261 = vsel %vm253, %v231, 0
      %v264 = vsel %vm253, %v232, 0
      %v267 = vsel %vm253, %v233, 0
      %v270 = vsel %vm253, %v234, 0
      %v273 = vsel %vm253, %v235, 0
      %v276 = vsel %vm253, %v236, 0
      %v279 = vsel %vm253, %v237, 0
      %v282 = vsel %vm253, %v238, 0
      %v285 = vsel %vm253, %v239, 0
      %v288 = vsel %vm253, %v240, 0
      %v291 = vsel %vm253, %v241, 0
      %v294 = vsel %vm253, %v242, 0
      %v297 = vsel %vm253, %v243, 0
      %v300 = vsel %vm253, %v244, 0
      %302 = vmatpush.msra.mxu0 0.0
      %303 = vmatpush.msra.mxu0 0.0
      %304 = vmatpush.msra.mxu0 0.0
      %305 = vmatpush.msra.mxu0 0.0
      %306 = vmatpush.msra.mxu0 0.0
      %307 = vmatpush.msra.mxu0 0.0
      %308 = vmatpush.msra.mxu0 0.0
      %309 = vmatpush.msra.mxu0 0.0
      %310 = vmatpush.msra.mxu0 0.0
      %311 = vmatpush.msra.mxu0 0.0
      %312 = vmatpush.msra.mxu0 0.0
      %313 = vmatpush.msra.mxu0 0.0
      %314 = vmatpush.msra.mxu0 %v248
      %315 = vmatpush.msra.mxu0 %v247
      %316 = vmatpush.msra.mxu0 %v246
      %317 = vmatpush.msra.mxu0 %v245
      %318 = vmatmul.f32.gmra.mxu0 %v255
      %v319 = vpop.f32.mrf.mxu0
      %v320 = vadd.f32 %v251, %v319
      %321 = vmatmul.f32.gmra.mxu0 %v258
      %v322 = vpop.f32.mrf.mxu0
      %v323 = vadd.f32 %v251, %v322
      %324 = vmatmul.f32.gmra.mxu0 %v261
      %v325 = vpop.f32.mrf.mxu0
      %v326 = vadd.f32 %v251, %v325
      %327 = vmatmul.f32.gmra.mxu0 %v264
      %v328 = vpop.f32.mrf.mxu0
      %v329 = vadd.f32 %v251, %v328
      %330 = vmatmul.f32.gmra.mxu0 %v267
      %v331 = vpop.f32.mrf.mxu0
      %v332 = vadd.f32 %v251, %v331
      %333 = vmatmul.f32.gmra.mxu0 %v270
      %v334 = vpop.f32.mrf.mxu0
      %v335 = vadd.f32 %v251, %v334
      %336 = vmatmul.f32.gmra.mxu0 %v273
      %v337 = vpop.f32.mrf.mxu0
      %v338 = vadd.f32 %v251, %v337
      %339 = vmatmul.f32.gmra.mxu0 %v276
      %v340 = vpop.f32.mrf.mxu0
      %v341 = vadd.f32 %v251, %v340
      %342 = vmatmul.f32.gmra.mxu0 %v279
      %v343 = vpop.f32.mrf.mxu0
      %v344 = vadd.f32 %v251, %v343
      %345 = vmatmul.f32.gmra.mxu0 %v282
      %v346 = vpop.f32.mrf.mxu0
      %v347 = vadd.f32 %v251, %v346
      %348 = vmatmul.f32.gmra.mxu0 %v285
      %v349 = vpop.f32.mrf.mxu0
      %v350 = vadd.f32 %v251, %v349
      %351 = vmatmul.f32.gmra.mxu0 %v288
      %v352 = vpop.f32.mrf.mxu0
      %v353 = vadd.f32 %v251, %v352
      %354 = vmatmul.f32.gmra.mxu0 %v291
      %v355 = vpop.f32.mrf.mxu0
      %v356 = vadd.f32 %v251, %v355
      %357 = vmatmul.f32.gmra.mxu0 %v294
      %v358 = vpop.f32.mrf.mxu0
      %v359 = vadd.f32 %v251, %v358
      %360 = vmatmul.f32.gmra.mxu0 %v297
      %v361 = vpop.f32.mrf.mxu0
      %v362 = vadd.f32 %v251, %v361
      %363 = vmatmul.f32.gmra.mxu0 %v300
      %v364 = vpop.f32.mrf.mxu0
      %v365 = vadd.f32 %v251, %v364
      %366 = vdwg.mxu0
      %v367 = vmax.f32 %v320, 0.0
      %v368 = vmax.f32 %v323, 0.0
      %v369 = vmax.f32 %v326, 0.0
      %v370 = vmax.f32 %v329, 0.0
      %v371 = vmax.f32 %v332, 0.0
      %v372 = vmax.f32 %v335, 0.0
      %v373 = vmax.f32 %v338, 0.0
      %v374 = vmax.f32 %v341, 0.0
      %v375 = vmax.f32 %v344, 0.0
      %v376 = vmax.f32 %v347, 0.0
      %v377 = vmax.f32 %v350, 0.0
      %v378 = vmax.f32 %v353, 0.0
      %v379 = vmax.f32 %v356, 0.0
      %v380 = vmax.f32 %v359, 0.0
      %v381 = vmax.f32 %v362, 0.0
      %v382 = vmax.f32 %v365, 0.0
      %v383 = vld [vmem:[%s3] sm:$0x1]
      %v385 = vperm.slane %v383, 0
      %v387 = vmul.f32 %v367, %v385
      %v388 = vmul.f32 %v368, %v385
      %v389 = vmul.f32 %v369, %v385
      %v390 = vmul.f32 %v370, %v385
      %v391 = vmul.f32 %v371, %v385
      %v392 = vmul.f32 %v372, %v385
      %v393 = vmul.f32 %v373, %v385
      %v394 = vmul.f32 %v374, %v385
      %v395 = vmul.f32 %v375, %v385
      %v396 = vmul.f32 %v376, %v385
      %v397 = vmul.f32 %v377, %v385
      %v398 = vmul.f32 %v378, %v385
      %v399 = vmul.f32 %v379, %v385
      %v400 = vmul.f32 %v380, %v385
      %v401 = vmul.f32 %v381, %v385
      %v402 = vmul.f32 %v382, %v385
      %vm403 = vcmask 523264
      %v404 = vsel %vm403, %v387, 0.0
      %405 = vadd.xlane.f32.xlu0 %v404
      %v406 = vpop.xlane.xlu0 %405
      %v407 = vsel %vm403, %v388, 0.0
      %408 = vadd.xlane.f32.xlu0 %v407
      %v409 = vpop.xlane.xlu0 %408
      %v410 = vsel %vm403, %v389, 0.0
      %411 = vadd.xlane.f32.xlu0 %v410
      %v412 = vpop.xlane.xlu0 %411
      %v413 = vsel %vm403, %v390, 0.0
      %414 = vadd.xlane.f32.xlu0 %v413
      %v415 = vpop.xlane.xlu0 %414
      %v416 = vsel %vm403, %v391, 0.0
      %417 = vadd.xlane.f32.xlu0 %v416
      %v418 = vpop.xlane.xlu0 %417
      %v419 = vsel %vm403, %v392, 0.0
      %420 = vadd.xlane.f32.xlu0 %v419
      %v421 = vpop.xlane.xlu0 %420
      %v422 = vsel %vm403, %v393, 0.0
      %423 = vadd.xlane.f32.xlu0 %v422
      %v424 = vpop.xlane.xlu0 %423
      %v425 = vsel %vm403, %v394, 0.0
      %426 = vadd.xlane.f32.xlu0 %v425
      %v427 = vpop.xlane.xlu0 %426
      %v428 = vsel %vm403, %v395, 0.0
      %429 = vadd.xlane.f32.xlu0 %v428
      %v430 = vpop.xlane.xlu0 %429
      %v431 = vsel %vm403, %v396, 0.0
      %432 = vadd.xlane.f32.xlu0 %v431
      %v433 = vpop.xlane.xlu0 %432
      %v434 = vsel %vm403, %v397, 0.0
      %435 = vadd.xlane.f32.xlu0 %v434
      %v436 = vpop.xlane.xlu0 %435
      %v437 = vsel %vm403, %v398, 0.0
      %438 = vadd.xlane.f32.xlu0 %v437
      %v439 = vpop.xlane.xlu0 %438
      %v440 = vsel %vm403, %v399, 0.0
      %441 = vadd.xlane.f32.xlu0 %v440
      %v442 = vpop.xlane.xlu0 %441
      %v443 = vsel %vm403, %v400, 0.0
      %444 = vadd.xlane.f32.xlu0 %v443
      %v445 = vpop.xlane.xlu0 %444
      %v446 = vsel %vm403, %v401, 0.0
      %447 = vadd.xlane.f32.xlu0 %v446
      %v448 = vpop.xlane.xlu0 %447
      %v449 = vsel %vm403, %v402, 0.0
      %450 = vadd.xlane.f32.xlu0 %v449
      %v451 = vpop.xlane.xlu0 %450
      %s452 = sld [smem:[#allocation2]]
      %v453 = vstv %s452
      %v454 = vadd.f32 %v406, %v453
      %v455 = vadd.f32 %v409, %v453
      %v456 = vadd.f32 %v412, %v453
      %v457 = vadd.f32 %v415, %v453
      %v458 = vadd.f32 %v418, %v453
      %v459 = vadd.f32 %v421, %v453
      %v460 = vadd.f32 %v424, %v453
      %v461 = vadd.f32 %v427, %v453
      %v462 = vadd.f32 %v430, %v453
      %v463 = vadd.f32 %v433, %v453
      %v464 = vadd.f32 %v436, %v453
      %v465 = vadd.f32 %v439, %v453
      %v466 = vadd.f32 %v442, %v453
      %v467 = vadd.f32 %v445, %v453
      %v468 = vadd.f32 %v448, %v453
      %v469 = vadd.f32 %v451, %v453
      %v470 = vxor.u32 %v454, 2147483648
      %v471 = vxor.u32 %v455, 2147483648
      %v472 = vxor.u32 %v456, 2147483648
      %v473 = vxor.u32 %v457, 2147483648
      %v474 = vxor.u32 %v458, 2147483648
      %v475 = vxor.u32 %v459, 2147483648
      %v476 = vxor.u32 %v460, 2147483648
      %v477 = vxor.u32 %v461, 2147483648
      %v478 = vxor.u32 %v462, 2147483648
      %v479 = vxor.u32 %v463, 2147483648
      %v480 = vxor.u32 %v464, 2147483648
      %v481 = vxor.u32 %v465, 2147483648
      %v482 = vxor.u32 %v466, 2147483648
      %v483 = vxor.u32 %v467, 2147483648
      %v484 = vxor.u32 %v468, 2147483648
      %v485 = vxor.u32 %v469, 2147483648
      %v486 = vmul.f32 %v470, 1.442695
      %v487 = vpow.pop %v486
      %v488 = vmul.f32 %v471, 1.442695
      %v489 = vpow.pop %v488
      %v490 = vmul.f32 %v472, 1.442695
      %v491 = vpow.pop %v490
      %v492 = vmul.f32 %v473, 1.442695
      %v493 = vpow.pop %v492
      %v494 = vmul.f32 %v474, 1.442695
      %v495 = vpow.pop %v494
      %v496 = vmul.f32 %v475, 1.442695
      %v497 = vpow.pop %v496
      %v498 = vmul.f32 %v476, 1.442695
      %v499 = vpow.pop %v498
      %v500 = vmul.f32 %v477, 1.442695
      %v501 = vpow.pop %v500
      %v502 = vmul.f32 %v478, 1.442695
      %v503 = vpow.pop %v502
      %v504 = vmul.f32 %v479, 1.442695
      %v505 = vpow.pop %v504
      %v506 = vmul.f32 %v480, 1.442695
      %v507 = vpow.pop %v506
      %v508 = vmul.f32 %v481, 1.442695
      %v509 = vpow.pop %v508
      %v510 = vmul.f32 %v482, 1.442695
      %v511 = vpow.pop %v510
      %v512 = vmul.f32 %v483, 1.442695
      %v513 = vpow.pop %v512
      %v514 = vmul.f32 %v484, 1.442695
      %v515 = vpow.pop %v514
      %v516 = vmul.f32 %v485, 1.442695
      %v517 = vpow.pop %v516
      %v518 = vadd.f32 %v487, 1.0
      %v519 = vadd.f32 %v489, 1.0
      %v520 = vadd.f32 %v491, 1.0
      %v521 = vadd.f32 %v493, 1.0
      %v522 = vadd.f32 %v495, 1.0
      %v523 = vadd.f32 %v497, 1.0
      %v524 = vadd.f32 %v499, 1.0
      %v525 = vadd.f32 %v501, 1.0
      %v526 = vadd.f32 %v503, 1.0
      %v527 = vadd.f32 %v505, 1.0
      %v528 = vadd.f32 %v507, 1.0
      %v529 = vadd.f32 %v509, 1.0
      %v530 = vadd.f32 %v511, 1.0
      %v531 = vadd.f32 %v513, 1.0
      %v532 = vadd.f32 %v515, 1.0
      %v533 = vadd.f32 %v517, 1.0
      %v534 = vrcp.pop %v518
      %v535 = vmul.f32 %v518, %v534
      %v536 = vsub.f32 1.0, %v535
      %v537 = vmul.f32 %v534, %v536
      %v538 = vadd.f32 %v534, %v537
      %vm539 = vweird.f32 %v518
      %vm540 = vweird.f32 %v534
      %vm541 = vmor %vm539, %vm540
      %v542 = vsel %vm541, %v534, %v538
      %v543 = vand.u32 2147483647, %v518
      %vm544 = vcmp.eq.f32.partialorder %v543, 8.507059e+37
      %v545 = vand.u32 %v518, 2147483648
      %v546 = vor.u32 1.1754944e-38, %v545
      %v547 = vsel %vm544, %v546, %v542
      %v548 = vmul.f32 1.0, %v547
      %v549 = vrcp.pop %v519
      %v550 = vmul.f32 %v519, %v549
      %v551 = vsub.f32 1.0, %v550
      %v552 = vmul.f32 %v549, %v551
      %v553 = vadd.f32 %v549, %v552
      %vm554 = vweird.f32 %v519
      %vm555 = vweird.f32 %v549
      %vm556 = vmor %vm554, %vm555
      %v557 = vsel %vm556, %v549, %v553
      %v558 = vand.u32 2147483647, %v519
      %vm559 = vcmp.eq.f32.partialorder %v558, 8.507059e+37
      %v560 = vand.u32 %v519, 2147483648
      %v561 = vor.u32 1.1754944e-38, %v560
      %v562 = vsel %vm559, %v561, %v557
      %v563 = vmul.f32 1.0, %v562
      %v564 = vrcp.pop %v520
      %v565 = vmul.f32 %v520, %v564
      %v566 = vsub.f32 1.0, %v565
      %v567 = vmul.f32 %v564, %v566
      %v568 = vadd.f32 %v564, %v567
      %vm569 = vweird.f32 %v520
      %vm570 = vweird.f32 %v564
      %vm571 = vmor %vm569, %vm570
      %v572 = vsel %vm571, %v564, %v568
      %v573 = vand.u32 2147483647, %v520
      %vm574 = vcmp.eq.f32.partialorder %v573, 8.507059e+37
      %v575 = vand.u32 %v520, 2147483648
      %v576 = vor.u32 1.1754944e-38, %v575
      %v577 = vsel %vm574, %v576, %v572
      %v578 = vmul.f32 1.0, %v577
      %v579 = vrcp.pop %v521
      %v580 = vmul.f32 %v521, %v579
      %v581 = vsub.f32 1.0, %v580
      %v582 = vmul.f32 %v579, %v581
      %v583 = vadd.f32 %v579, %v582
      %vm584 = vweird.f32 %v521
      %vm585 = vweird.f32 %v579
      %vm586 = vmor %vm584, %vm585
      %v587 = vsel %vm586, %v579, %v583
      %v588 = vand.u32 2147483647, %v521
      %vm589 = vcmp.eq.f32.partialorder %v588, 8.507059e+37
      %v590 = vand.u32 %v521, 2147483648
      %v591 = vor.u32 1.1754944e-38, %v590
      %v592 = vsel %vm589, %v591, %v587
      %v593 = vmul.f32 1.0, %v592
      %v594 = vrcp.pop %v522
      %v595 = vmul.f32 %v522, %v594
      %v596 = vsub.f32 1.0, %v595
      %v597 = vmul.f32 %v594, %v596
      %v598 = vadd.f32 %v594, %v597
      %vm599 = vweird.f32 %v522
      %vm600 = vweird.f32 %v594
      %vm601 = vmor %vm599, %vm600
      %v602 = vsel %vm601, %v594, %v598
      %v603 = vand.u32 2147483647, %v522
      %vm604 = vcmp.eq.f32.partialorder %v603, 8.507059e+37
      %v605 = vand.u32 %v522, 2147483648
      %v606 = vor.u32 1.1754944e-38, %v605
      %v607 = vsel %vm604, %v606, %v602
      %v608 = vmul.f32 1.0, %v607
      %v609 = vrcp.pop %v523
      %v610 = vmul.f32 %v523, %v609
      %v611 = vsub.f32 1.0, %v610
      %v612 = vmul.f32 %v609, %v611
      %v613 = vadd.f32 %v609, %v612
      %vm614 = vweird.f32 %v523
      %vm615 = vweird.f32 %v609
      %vm616 = vmor %vm614, %vm615
      %v617 = vsel %vm616, %v609, %v613
      %v618 = vand.u32 2147483647, %v523
      %vm619 = vcmp.eq.f32.partialorder %v618, 8.507059e+37
      %v620 = vand.u32 %v523, 2147483648
      %v621 = vor.u32 1.1754944e-38, %v620
      %v622 = vsel %vm619, %v621, %v617
      %v623 = vmul.f32 1.0, %v622
      %v624 = vrcp.pop %v524
      %v625 = vmul.f32 %v524, %v624
      %v626 = vsub.f32 1.0, %v625
      %v627 = vmul.f32 %v624, %v626
      %v628 = vadd.f32 %v624, %v627
      %vm629 = vweird.f32 %v524
      %vm630 = vweird.f32 %v624
      %vm631 = vmor %vm629, %vm630
      %v632 = vsel %vm631, %v624, %v628
      %v633 = vand.u32 2147483647, %v524
      %vm634 = vcmp.eq.f32.partialorder %v633, 8.507059e+37
      %v635 = vand.u32 %v524, 2147483648
      %v636 = vor.u32 1.1754944e-38, %v635
      %v637 = vsel %vm634, %v636, %v632
      %v638 = vmul.f32 1.0, %v637
      %v639 = vrcp.pop %v525
      %v640 = vmul.f32 %v525, %v639
      %v641 = vsub.f32 1.0, %v640
      %v642 = vmul.f32 %v639, %v641
      %v643 = vadd.f32 %v639, %v642
      %vm644 = vweird.f32 %v525
      %vm645 = vweird.f32 %v639
      %vm646 = vmor %vm644, %vm645
      %v647 = vsel %vm646, %v639, %v643
      %v648 = vand.u32 2147483647, %v525
      %vm649 = vcmp.eq.f32.partialorder %v648, 8.507059e+37
      %v650 = vand.u32 %v525, 2147483648
      %v651 = vor.u32 1.1754944e-38, %v650
      %v652 = vsel %vm649, %v651, %v647
      %v653 = vmul.f32 1.0, %v652
      %v654 = vrcp.pop %v526
      %v655 = vmul.f32 %v526, %v654
      %v656 = vsub.f32 1.0, %v655
      %v657 = vmul.f32 %v654, %v656
      %v658 = vadd.f32 %v654, %v657
      %vm659 = vweird.f32 %v526
      %vm660 = vweird.f32 %v654
      %vm661 = vmor %vm659, %vm660
      %v662 = vsel %vm661, %v654, %v658
      %v663 = vand.u32 2147483647, %v526
      %vm664 = vcmp.eq.f32.partialorder %v663, 8.507059e+37
      %v665 = vand.u32 %v526, 2147483648
      %v666 = vor.u32 1.1754944e-38, %v665
      %v667 = vsel %vm664, %v666, %v662
      %v668 = vmul.f32 1.0, %v667
      %v669 = vrcp.pop %v527
      %v670 = vmul.f32 %v527, %v669
      %v671 = vsub.f32 1.0, %v670
      %v672 = vmul.f32 %v669, %v671
      %v673 = vadd.f32 %v669, %v672
      %vm674 = vweird.f32 %v527
      %vm675 = vweird.f32 %v669
      %vm676 = vmor %vm674, %vm675
      %v677 = vsel %vm676, %v669, %v673
      %v678 = vand.u32 2147483647, %v527
      %vm679 = vcmp.eq.f32.partialorder %v678, 8.507059e+37
      %v680 = vand.u32 %v527, 2147483648
      %v681 = vor.u32 1.1754944e-38, %v680
      %v682 = vsel %vm679, %v681, %v677
      %v683 = vmul.f32 1.0, %v682
      %v684 = vrcp.pop %v528
      %v685 = vmul.f32 %v528, %v684
      %v686 = vsub.f32 1.0, %v685
      %v687 = vmul.f32 %v684, %v686
      %v688 = vadd.f32 %v684, %v687
      %vm689 = vweird.f32 %v528
      %vm690 = vweird.f32 %v684
      %vm691 = vmor %vm689, %vm690
      %v692 = vsel %vm691, %v684, %v688
      %v693 = vand.u32 2147483647, %v528
      %vm694 = vcmp.eq.f32.partialorder %v693, 8.507059e+37
      %v695 = vand.u32 %v528, 2147483648
      %v696 = vor.u32 1.1754944e-38, %v695
      %v697 = vsel %vm694, %v696, %v692
      %v698 = vmul.f32 1.0, %v697
      %v699 = vrcp.pop %v529
      %v700 = vmul.f32 %v529, %v699
      %v701 = vsub.f32 1.0, %v700
      %v702 = vmul.f32 %v699, %v701
      %v703 = vadd.f32 %v699, %v702
      %vm704 = vweird.f32 %v529
      %vm705 = vweird.f32 %v699
      %vm706 = vmor %vm704, %vm705
      %v707 = vsel %vm706, %v699, %v703
      %v708 = vand.u32 2147483647, %v529
      %vm709 = vcmp.eq.f32.partialorder %v708, 8.507059e+37
      %v710 = vand.u32 %v529, 2147483648
      %v711 = vor.u32 1.1754944e-38, %v710
      %v712 = vsel %vm709, %v711, %v707
      %v713 = vmul.f32 1.0, %v712
      %v714 = vrcp.pop %v530
      %v715 = vmul.f32 %v530, %v714
      %v716 = vsub.f32 1.0, %v715
      %v717 = vmul.f32 %v714, %v716
      %v718 = vadd.f32 %v714, %v717
      %vm719 = vweird.f32 %v530
      %vm720 = vweird.f32 %v714
      %vm721 = vmor %vm719, %vm720
      %v722 = vsel %vm721, %v714, %v718
      %v723 = vand.u32 2147483647, %v530
      %vm724 = vcmp.eq.f32.partialorder %v723, 8.507059e+37
      %v725 = vand.u32 %v530, 2147483648
      %v726 = vor.u32 1.1754944e-38, %v725
      %v727 = vsel %vm724, %v726, %v722
      %v728 = vmul.f32 1.0, %v727
      %v729 = vrcp.pop %v531
      %v730 = vmul.f32 %v531, %v729
      %v731 = vsub.f32 1.0, %v730
      %v732 = vmul.f32 %v729, %v731
      %v733 = vadd.f32 %v729, %v732
      %vm734 = vweird.f32 %v531
      %vm735 = vweird.f32 %v729
      %vm736 = vmor %vm734, %vm735
      %v737 = vsel %vm736, %v729, %v733
      %v738 = vand.u32 2147483647, %v531
      %vm739 = vcmp.eq.f32.partialorder %v738, 8.507059e+37
      %v740 = vand.u32 %v531, 2147483648
      %v741 = vor.u32 1.1754944e-38, %v740
      %v742 = vsel %vm739, %v741, %v737
      %v743 = vmul.f32 1.0, %v742
      %v744 = vrcp.pop %v532
      %v745 = vmul.f32 %v532, %v744
      %v746 = vsub.f32 1.0, %v745
      %v747 = vmul.f32 %v744, %v746
      %v748 = vadd.f32 %v744, %v747
      %vm749 = vweird.f32 %v532
      %vm750 = vweird.f32 %v744
      %vm751 = vmor %vm749, %vm750
      %v752 = vsel %vm751, %v744, %v748
      %v753 = vand.u32 2147483647, %v532
      %vm754 = vcmp.eq.f32.partialorder %v753, 8.507059e+37
      %v755 = vand.u32 %v532, 2147483648
      %v756 = vor.u32 1.1754944e-38, %v755
      %v757 = vsel %vm754, %v756, %v752
      %v758 = vmul.f32 1.0, %v757
      %v759 = vrcp.pop %v533
      %v760 = vmul.f32 %v533, %v759
      %v761 = vsub.f32 1.0, %v760
      %v762 = vmul.f32 %v759, %v761
      %v763 = vadd.f32 %v759, %v762
      %vm764 = vweird.f32 %v533
      %vm765 = vweird.f32 %v759
      %vm766 = vmor %vm764, %vm765
      %v767 = vsel %vm766, %v759, %v763
      %v768 = vand.u32 2147483647, %v533
      %vm769 = vcmp.eq.f32.partialorder %v768, 8.507059e+37
      %v770 = vand.u32 %v533, 2147483648
      %v771 = vor.u32 1.1754944e-38, %v770
      %v772 = vsel %vm769, %v771, %v767
      %v773 = vmul.f32 1.0, %v772
      %vm774 = vcmask 7168
      %775 = vst.msk [vmem:[%s227] sm:$0xff] %vm774, %v548
      %776 = vst.msk [vmem:[%s227 + $0x8] sm:$0xff] %vm774, %v563
      %777 = vst.msk [vmem:[%s227 + $0x10] sm:$0xff] %vm774, %v578
      %778 = vst.msk [vmem:[%s227 + $0x18] sm:$0xff] %vm774, %v593
      %779 = vst.msk [vmem:[%s227 + $0x20] sm:$0xff] %vm774, %v608
      %780 = vst.msk [vmem:[%s227 + $0x28] sm:$0xff] %vm774, %v623
      %781 = vst.msk [vmem:[%s227 + $0x30] sm:$0xff] %vm774, %v638
      %782 = vst.msk [vmem:[%s227 + $0x38] sm:$0xff] %vm774, %v653
      %783 = vst.msk [vmem:[%s227 + $0x40] sm:$0xff] %vm774, %v668
      %784 = vst.msk [vmem:[%s227 + $0x48] sm:$0xff] %vm774, %v683
      %785 = vst.msk [vmem:[%s227 + $0x50] sm:$0xff] %vm774, %v698
      %786 = vst.msk [vmem:[%s227 + $0x58] sm:$0xff] %vm774, %v713
      %787 = vst.msk [vmem:[%s227 + $0x60] sm:$0xff] %vm774, %v728
      %788 = vst.msk [vmem:[%s227 + $0x68] sm:$0xff] %vm774, %v743
      %789 = vst.msk [vmem:[%s227 + $0x70] sm:$0xff] %vm774, %v758
      %790 = vst.msk [vmem:[%s227 + $0x78] sm:$0xff] %vm774, %v773
      %s791 = smul.u32 16, %s17
      %p792 = scmp.lt.s32.totalorder %s791, 31
      %s793 = scalar_select %p792, %s791, 31
      %s794 = smul.addr %s793, 8
      %s795 = scalar_lea.vmem %s5, %s794
      // Predicated region
      $region41: #{tpu_custom_call.1} parent=39 // pred_check
        %p796 = pneg %p145
      $region42: #{tpu_custom_call.1} parent=39 // pred_check_branch
        %798 = sbr.rel (%p796) target = $region44
      $region43: #{tpu_custom_call.1} parent=39 // pred_region
        %s799 = smul.u32 16, %s17
      $region44: #{tpu_custom_call.1} parent=39 // pred_fallthru
        _
    $region40: #{tpu_custom_call.1} parent=5 // pred_fallthru
      _
    %p800 = scmp.le.s32.totalorder 2, %s12
    // Predicated region
    $region45: #{tpu_custom_call.1} parent=5 // pred_check
      %p801 = pneg %p800
    $region46: #{tpu_custom_call.1} parent=5 // pred_check_branch
      %803 = sbr.rel (%p801) target = $region48
    $region47: #{tpu_custom_call.1} parent=5 // pred_region
      %s804 = ssub.s32 %s12, 2
      // Predicated region
      $region49: #{tpu_custom_call.1} parent=47 // pred_check
        %p805 = pneg %p151
      $region50: #{tpu_custom_call.1} parent=47 // pred_check_branch
        %807 = sbr.rel (%p805) target = $region52
      $region51: #{tpu_custom_call.1} parent=47 // pred_region
        %s808 = smul.u32 16, %s18
        %p809 = scmp.lt.s32.totalorder %s808, 31
        %s810 = scalar_select %p809, %s808, 31
        %s811 = smul.addr %s810, 8
        %s812 = scalar_lea.vmem %s5, %s811
      $region52: #{tpu_custom_call.1} parent=47 // pred_fallthru
        _
    $region48: #{tpu_custom_call.1} parent=5 // pred_fallthru
      _
  $region6: #{tpu_custom_call.1} parent=0 // loop_footer
    %s16 = sadd.s32 1, %s12
  $region7: #{tpu_custom_call.1} parent=0 // loop_footer_branch
    %11 = sbr.rel target = $region3
  $region8: #{tpu_custom_call.1} parent=0 // loop_exit
    _

</llo_original>
